<compile_context>
chip_gen: v5e
topology: v5e:2x2
jax: 0.10.0
libtpu: 0.0.40
codegen_flags: <defaults>
</compile_context>

<pallas_src>
import functools

import jax
import jax.numpy as jnp
from jax.experimental import pallas as pl
from jax.experimental.pallas import tpu as pltpu


def gpt_kernel(data_ref, wx_ref, wy_ref, b_ref, w2c_ref, cb2_ref, out_ref):
    # data_ref: (2, TN)  -- row 0 = x column, row 1 = y column (N on lanes)
    # wx/wy/b/w2c: (L, 1) -- fused per-feature weights (L = n*H, on sublanes)
    # cb2_ref: (1, 1)     -- sum_i c_i * b2_i
    # out_ref: (1, TN)    -- lane-dense output tile
    dx = data_ref[0:1, :]                              # (1, TN)
    dy = data_ref[1:2, :]                              # (1, TN)

    pre = wx_ref[...] * dx + wy_ref[...] * dy + b_ref[...]   # (L, TN) via broadcast
    h = jnp.tanh(pre)                                         # EUP
    weighted = h * w2c_ref[...]                               # (L, TN)
    out_ref[...] = jnp.sum(weighted, axis=0, keepdims=True) + cb2_ref[...]


@functools.partial(jax.jit, static_argnames=("tile_n",))
def gpt_forward(data, s, c, w1x, w1y, b1, w2, b2, *, tile_n=512):
    assert tile_n % 128 == 0, "tile_n must be a multiple of 128 (lane width)"
    N = data.shape[0]
    n, H = w1x.shape
    L = n * H
    L_pad = max(8, ((L + 7) // 8) * 8)                 # sublane multiple; zero-padded

    # ---- fold the static column-selection pattern + s, c, b2 into derived weights.
    # block i uses z0 = x + s0 always; z1 = x + s[i+1] for i < n-1, y + s0 for i = n-1.
    s_sel = jnp.concatenate([s[0, 1:], s[0, :1]])      # (n,)
    is_last = (jnp.arange(n) == n - 1)[:, None]        # (n, 1)
    wx = w1x + jnp.where(is_last, 0.0, w1y)            # coefficient of data_x
    wy = jnp.where(is_last, w1y, 0.0)                  # coefficient of data_y
    b_eff = b1 + s[0, 0] * w1x + s_sel[:, None] * w1y  # folded biases
    w2c = c[0][:, None] * w2                           # fold final linear weights
    cb2 = jnp.sum(c[0] * b2[0]).reshape(1, 1)          # fold final constant

    def col(a):
        flat = jnp.pad(a.reshape(-1), (0, L_pad - L))  # zero pad keeps reduce exact
        return flat.reshape(L_pad, 1)

    wx_c, wy_c, b_c, w2c_c = col(wx), col(wy), col(b_eff), col(w2c)

    # ---- lane-dense data/output layout: N on lanes, padded to a tile multiple.
    N_pad = ((N + tile_n - 1) // tile_n) * tile_n
    data_t = jnp.pad(data, ((0, N_pad - N), (0, 0))).T            # (2, N_pad)

    grid_spec = pltpu.PrefetchScalarGridSpec(
        num_scalar_prefetch=0,
        grid=(N_pad // tile_n,),
        in_specs=[
            pl.BlockSpec((2, tile_n), lambda i: (0, i)),   # data tile (lane-dense)
            pl.BlockSpec((L_pad, 1), lambda i: (0, 0)),    # wx
            pl.BlockSpec((L_pad, 1), lambda i: (0, 0)),    # wy
            pl.BlockSpec((L_pad, 1), lambda i: (0, 0)),    # b_eff
            pl.BlockSpec((L_pad, 1), lambda i: (0, 0)),    # w2c
            pl.BlockSpec((1, 1), lambda i: (0, 0)),        # cb2
        ],
        out_specs=pl.BlockSpec((1, tile_n), lambda i: (0, i)),
    )

    out = pl.pallas_call(
        gpt_kernel,
        out_shape=jax.ShapeDtypeStruct((1, N_pad), jnp.float32),
        grid_spec=grid_spec,
        compiler_params=pltpu.CompilerParams(
            dimension_semantics=("parallel",),             # megacore on v7x
        ),
    )(data_t, wx_c, wy_c, b_c, w2c_c, cb2)

    return out[0, :N].reshape(N, 1)


def gpt_reference(data, s, c, w1x, w1y, b1, w2, b2):
    """Plain-JAX mirror of the PyTorch forward (for correctness check)."""
    x = data[:, 0:1] + s
    y = data[:, 1:2] + s
    xy = jnp.concatenate([x, y], axis=1)
    n = s.shape[1]
    cols = []
    for i in range(n):
        z = xy[:, 0:2 * (i + 1):(i + 1)]                      # (N, 2), cols [0, i+1]
        w1_i = jnp.stack([w1x[i], w1y[i]], axis=0)            # (2, H)
        h = jnp.tanh(z @ w1_i + b1[i][None, :])               # (N, H)
        cols.append(h @ w2[i][:, None] + b2[0, i])            # (N, 1)
    a = jnp.concatenate(cols, axis=1)                         # (N, n)
    return a @ c.T                                            # (N, 1)


if __name__ == "__main__":
    # layers = [1, n, n, 1]; N collocation points, P[i] are 2 -> H -> 1 tanh MLPs.
    N, n, H = 2000, 4, 32                                     # n*H = 128 = one lane width

    key = jax.random.PRNGKey(0)
    k_data, k_s, k_c, k_w1x, k_w1y, k_b1, k_w2, k_b2 = jax.random.split(key, 8)

    data = jax.random.uniform(k_data, (N, 2), jnp.float32, -1.0, 1.0)
    initial_s = jax.random.normal(k_s, (1, n), jnp.float32)   # bias of linears[0]/[1]
    initial_c = jax.random.normal(k_c, (1, n), jnp.float32)   # weight of linears[2]
    w1x = jax.random.normal(k_w1x, (n, H), jnp.float32) * 0.5
    w1y = jax.random.normal(k_w1y, (n, H), jnp.float32) * 0.5
    b1 = jax.random.normal(k_b1, (n, H), jnp.float32) * 0.1
    w2 = jax.random.normal(k_w2, (n, H), jnp.float32) * 0.5
    b2 = jax.random.normal(k_b2, (1, n), jnp.float32) * 0.1

    out = gpt_forward(data, initial_s, initial_c, w1x, w1y, b1, w2, b2, tile_n=512)
    out = jax.block_until_ready(out)

    ref = gpt_reference(data, initial_s, initial_c, w1x, w1y, b1, w2, b2)
    assert out.shape == (N, 1)
    err = float(jnp.max(jnp.abs(out - ref)))
    assert jnp.allclose(out, ref, rtol=1e-4, atol=1e-4), err

    print("KERNEL_OK")
</pallas_src>

<mosaic_0001>
module attributes {stable_mosaic.version = 11 : i64} {
  func.func @gpt_kernel(%arg0: i32, %arg1: memref<2x512xf32, #tpu.memory_space<vmem>>, %arg2: memref<128x1xf32, #tpu.memory_space<vmem>>, %arg3: memref<128x1xf32, #tpu.memory_space<vmem>>, %arg4: memref<128x1xf32, #tpu.memory_space<vmem>>, %arg5: memref<128x1xf32, #tpu.memory_space<vmem>>, %arg6: memref<1x1xf32, #tpu.memory_space<vmem>>, %arg7: memref<1x512xf32, #tpu.memory_space<vmem>>) attributes {dimension_semantics = [#tpu.dimension_semantics<parallel>], iteration_bounds = array<i64: 4>, scalar_prefetch = 0 : i64, scratch_operands = 0 : i64, tpu.core_type = #tpu.core_type<tc>, window_params = [{transform_indices = @transform_0, window_bounds = array<i64: 2, 512>}, {pipeline_mode = #tpu.pipeline_mode<synchronous>, transform_indices = @transform_1, window_bounds = array<i64: 128, 1>}, {pipeline_mode = #tpu.pipeline_mode<synchronous>, transform_indices = @transform_2, window_bounds = array<i64: 128, 1>}, {pipeline_mode = #tpu.pipeline_mode<synchronous>, transform_indices = @transform_3, window_bounds = array<i64: 128, 1>}, {pipeline_mode = #tpu.pipeline_mode<synchronous>, transform_indices = @transform_4, window_bounds = array<i64: 128, 1>}, {pipeline_mode = #tpu.pipeline_mode<synchronous>, transform_indices = @transform_5, window_bounds = array<i64: 1, 1>}, {transform_indices = @transform_6, window_bounds = array<i64: 1, 512>}]} {
    %c0 = arith.constant 0 : index
    %c0_0 = arith.constant 0 : index
    %0 = vector.load %arg1[%c0, %c0_0] : memref<2x512xf32, #tpu.memory_space<vmem>>, vector<1x512xf32>
    %c1 = arith.constant 1 : index
    %c0_1 = arith.constant 0 : index
    %1 = vector.load %arg1[%c1, %c0_1] : memref<2x512xf32, #tpu.memory_space<vmem>>, vector<1x512xf32>
    %c0_2 = arith.constant 0 : index
    %c0_3 = arith.constant 0 : index
    %2 = vector.load %arg2[%c0_2, %c0_3] : memref<128x1xf32, #tpu.memory_space<vmem>>, vector<128x1xf32>
    %3 = vector.broadcast %2 : vector<128x1xf32> to vector<128x512xf32>
    %4 = vector.broadcast %0 : vector<1x512xf32> to vector<128x512xf32>
    %5 = arith.mulf %3, %4 : vector<128x512xf32>
    %c0_4 = arith.constant 0 : index
    %c0_5 = arith.constant 0 : index
    %6 = vector.load %arg3[%c0_4, %c0_5] : memref<128x1xf32, #tpu.memory_space<vmem>>, vector<128x1xf32>
    %7 = vector.broadcast %6 : vector<128x1xf32> to vector<128x512xf32>
    %8 = vector.broadcast %1 : vector<1x512xf32> to vector<128x512xf32>
    %9 = arith.mulf %7, %8 : vector<128x512xf32>
    %10 = arith.addf %5, %9 : vector<128x512xf32>
    %c0_6 = arith.constant 0 : index
    %c0_7 = arith.constant 0 : index
    %11 = vector.load %arg4[%c0_6, %c0_7] : memref<128x1xf32, #tpu.memory_space<vmem>>, vector<128x1xf32>
    %12 = vector.broadcast %11 : vector<128x1xf32> to vector<128x512xf32>
    %13 = arith.addf %10, %12 : vector<128x512xf32>
    %14 = math.tanh %13 : vector<128x512xf32>
    %c0_8 = arith.constant 0 : index
    %c0_9 = arith.constant 0 : index
    %15 = vector.load %arg5[%c0_8, %c0_9] : memref<128x1xf32, #tpu.memory_space<vmem>>, vector<128x1xf32>
    %16 = vector.broadcast %15 : vector<128x1xf32> to vector<128x512xf32>
    %17 = arith.mulf %14, %16 : vector<128x512xf32>
    %cst = arith.constant dense<0.000000e+00> : vector<512xf32>
    %18 = vector.multi_reduction <add>, %17, %cst [0] : vector<128x512xf32> to vector<512xf32>
    %19 = vector.shape_cast %18 : vector<512xf32> to vector<1x512xf32>
    %c0_10 = arith.constant 0 : index
    %c0_11 = arith.constant 0 : index
    %20 = vector.load %arg6[%c0_10, %c0_11] : memref<1x1xf32, #tpu.memory_space<vmem>>, vector<1x1xf32>
    %21 = vector.broadcast %20 : vector<1x1xf32> to vector<1x512xf32>
    %22 = arith.addf %19, %21 : vector<1x512xf32>
    %c0_12 = arith.constant 0 : index
    %c0_13 = arith.constant 0 : index
    %23 = vector.load %arg7[%c0_12, %c0_13] : memref<1x512xf32, #tpu.memory_space<vmem>>, vector<1x512xf32>
    tpu.vector_store %arg7[%c0_12, %c0_13], %22 {strides = array<i32>} : memref<1x512xf32, #tpu.memory_space<vmem>>, vector<1x512xf32>,
    return
  }
  func.func @transform_0(%arg0: i32) -> (i32, i32) {
    %c0_i32 = arith.constant 0 : i32
    %c0_i32_0 = arith.constant 0 : i32
    return %c0_i32, %arg0 : i32, i32
  }
  func.func @transform_1(%arg0: i32) -> (i32, i32) {
    %c0_i32 = arith.constant 0 : i32
    %c0_i32_0 = arith.constant 0 : i32
    %c0_i32_1 = arith.constant 0 : i32
    return %c0_i32, %c0_i32_0 : i32, i32
  }
  func.func @transform_2(%arg0: i32) -> (i32, i32) {
    %c0_i32 = arith.constant 0 : i32
    %c0_i32_0 = arith.constant 0 : i32
    %c0_i32_1 = arith.constant 0 : i32
    return %c0_i32, %c0_i32_0 : i32, i32
  }
  func.func @transform_3(%arg0: i32) -> (i32, i32) {
    %c0_i32 = arith.constant 0 : i32
    %c0_i32_0 = arith.constant 0 : i32
    %c0_i32_1 = arith.constant 0 : i32
    return %c0_i32, %c0_i32_0 : i32, i32
  }
  func.func @transform_4(%arg0: i32) -> (i32, i32) {
    %c0_i32 = arith.constant 0 : i32
    %c0_i32_0 = arith.constant 0 : i32
    %c0_i32_1 = arith.constant 0 : i32
    return %c0_i32, %c0_i32_0 : i32, i32
  }
  func.func @transform_5(%arg0: i32) -> (i32, i32) {
    %c0_i32 = arith.constant 0 : i32
    %c0_i32_0 = arith.constant 0 : i32
    %c0_i32_1 = arith.constant 0 : i32
    return %c0_i32, %c0_i32_0 : i32, i32
  }
  func.func @transform_6(%arg0: i32) -> (i32, i32) {
    %c0_i32 = arith.constant 0 : i32
    %c0_i32_0 = arith.constant 0 : i32
    return %c0_i32, %arg0 : i32, i32
  }
}

</mosaic_0001>

<llo_original>
// kernel: gpt_forward.1
$region0: #{gpt_forward.1}
  #allocation0 [shape = 'u32[]', space=smem, size = 0x4, offset = 0x4, fixed_abs, tag = 'smem constant byte address 0x4 - core index']
  #allocation1 [shape = 'u32[72,128]{1,0:T(1,128)}', space=vmem, size = 0x9000, scoped, tag = 'internal scratch']
  #allocation2 [shape = 'f32[1,1]{1,0:T(1,128)S(1)}', space=vmem, size = 0x200, scoped, tag = 'scoped memory for gpt_forward.1']
  %s0 = inlined_call_operand.vmem [shape: f32[2,2048], index: 0, kind: input, shape index: {}]
  %s1 = inlined_call_operand.vmem [shape: f32[128,1], index: 1, kind: input, shape index: {}]
  %s2 = inlined_call_operand.vmem [shape: f32[128,1], index: 2, kind: input, shape index: {}]
  %s3 = inlined_call_operand.vmem [shape: f32[128,1], index: 3, kind: input, shape index: {}]
  %s4 = inlined_call_operand.vmem [shape: f32[128,1], index: 4, kind: input, shape index: {}]
  %s5 = inlined_call_operand.<no memory space> [shape: f32[1,1], index: 5, kind: input, shape index: {}]
  %s6 = inlined_call_operand.vmem [shape: f32[1,2048], index: 6, kind: output, shape index: {}]
  %s7 = sld [smem:[#allocation0]]
  $region57: #{gpt_forward.1} parent=0
    _
  %s9 = ssub.s32 1, %s7
  %s10 = scalar_select 0, %s9, %s7
  %v11 = vstv %s5
  %12 = vst [vmem:[#allocation2] sm:$0x1] %v11
  loop: start=0, step=1, limit=6
  $region2: #{gpt_forward.1} parent=0 // loop_pre_header
    _
  $region3: #{gpt_forward.1} parent=0 // loop_header
    %s14 = sphi 0, %s18
    %p15 = scmp.ge.s32.totalorder %s14, 6
    %s24 = sphi 0, %s26
    %s27 = sphi 0, %s24
    %s28 = sphi 0, %s27
    %s44 = sphi 0, %s28
    %s48 = sphi 0, %s48
    %s50 = sphi 0, %s48
    %s51 = sphi 0, %s50
    %s65 = sphi 0, %s51
    %s69 = sphi 0, %s69
    %s71 = sphi 0, %s69
    %s72 = sphi 0, %s71
    %s86 = sphi 0, %s72
    %s90 = sphi 0, %s90
    %s92 = sphi 0, %s90
    %s93 = sphi 0, %s92
    %s107 = sphi 0, %s93
    %s111 = sphi 0, %s111
    %s113 = sphi 0, %s111
    %s114 = sphi 0, %s113
    %s128 = sphi 0, %s114
    %s132 = sphi 0, %s132
    %s134 = sphi 0, %s132
    %s135 = sphi 0, %s134
    %s149 = sphi 0, %s135
    %s155 = sphi 0, %s157
    %s158 = sphi 0, %s155
    %s159 = sphi 0, %s158
    %s175 = sphi 0, %s159
  $region4: #{gpt_forward.1} parent=0 // loop_header_branch
    %17 = sbr.rel (%p15) target = $region8
  $region5: #{gpt_forward.1} parent=0 // loop_body
    %s19 = ssub.s32 %s14, 1
    %s20 = ssub.s32 %s14, 2
    %s21 = sadd.s32 %s14, 1
    %s22 = ssub.s32 %s14, %s21
    %p23 = scmp.eq.s32.totalorder %s22, 0
    %s25 = sadd.s32 %s24, 1
    %s26 = scalar_select %p23, %s24, %s25
    %p29 = pneg %p23
    %p30 = scmp.eq.s32.totalorder %s14, 3
    %p31 = por %p29, %p30
    %p32 = scmp.ne.s32.totalorder %s24, %s27
    %p33 = scmp.eq.s32.totalorder %s14, 0
    %p34 = por %p32, %p33
    %p35 = scmp.ne.s32.totalorder %s24, %s27
    %p36 = scmp.eq.s32.totalorder %s19, 3
    %p37 = por %p35, %p36
    %p38 = scmp.ne.s32.totalorder %s27, %s28
    %p39 = scmp.eq.s32.totalorder %s19, 0
    %p40 = por %p38, %p39
    %p41 = scmp.ne.s32.totalorder %s27, %s28
    %p42 = scmp.eq.s32.totalorder %s20, 3
    %p43 = por %p41, %p42
    %p45 = scmp.ne.s32.totalorder %s28, %s44
    %p46 = scmp.eq.s32.totalorder %s20, 0
    %p47 = por %p45, %p46
    %s49 = sadd.s32 %s48, 1
    %p52 = scmp.eq.s32.totalorder %s14, 3
    %p53 = scmp.ne.s32.totalorder %s48, %s50
    %p54 = scmp.eq.s32.totalorder %s14, 0
    %p55 = por %p53, %p54
    %p56 = scmp.ne.s32.totalorder %s48, %s50
    %p57 = scmp.eq.s32.totalorder %s19, 3
    %p58 = por %p56, %p57
    %p59 = scmp.ne.s32.totalorder %s50, %s51
    %p60 = scmp.eq.s32.totalorder %s19, 0
    %p61 = por %p59, %p60
    %p62 = scmp.ne.s32.totalorder %s50, %s51
    %p63 = scmp.eq.s32.totalorder %s20, 3
    %p64 = por %p62, %p63
    %p66 = scmp.ne.s32.totalorder %s51, %s65
    %p67 = scmp.eq.s32.totalorder %s20, 0
    %p68 = por %p66, %p67
    %s70 = sadd.s32 %s69, 1
    %p73 = scmp.eq.s32.totalorder %s14, 3
    %p74 = scmp.ne.s32.totalorder %s69, %s71
    %p75 = scmp.eq.s32.totalorder %s14, 0
    %p76 = por %p74, %p75
    %p77 = scmp.ne.s32.totalorder %s69, %s71
    %p78 = scmp.eq.s32.totalorder %s19, 3
    %p79 = por %p77, %p78
    %p80 = scmp.ne.s32.totalorder %s71, %s72
    %p81 = scmp.eq.s32.totalorder %s19, 0
    %p82 = por %p80, %p81
    %p83 = scmp.ne.s32.totalorder %s71, %s72
    %p84 = scmp.eq.s32.totalorder %s20, 3
    %p85 = por %p83, %p84
    %p87 = scmp.ne.s32.totalorder %s72, %s86
    %p88 = scmp.eq.s32.totalorder %s20, 0
    %p89 = por %p87, %p88
    %s91 = sadd.s32 %s90, 1
    %p94 = scmp.eq.s32.totalorder %s14, 3
    %p95 = scmp.ne.s32.totalorder %s90, %s92
    %p96 = scmp.eq.s32.totalorder %s14, 0
    %p97 = por %p95, %p96
    %p98 = scmp.ne.s32.totalorder %s90, %s92
    %p99 = scmp.eq.s32.totalorder %s19, 3
    %p100 = por %p98, %p99
    %p101 = scmp.ne.s32.totalorder %s92, %s93
    %p102 = scmp.eq.s32.totalorder %s19, 0
    %p103 = por %p101, %p102
    %p104 = scmp.ne.s32.totalorder %s92, %s93
    %p105 = scmp.eq.s32.totalorder %s20, 3
    %p106 = por %p104, %p105
    %p108 = scmp.ne.s32.totalorder %s93, %s107
    %p109 = scmp.eq.s32.totalorder %s20, 0
    %p110 = por %p108, %p109
    %s112 = sadd.s32 %s111, 1
    %p115 = scmp.eq.s32.totalorder %s14, 3
    %p116 = scmp.ne.s32.totalorder %s111, %s113
    %p117 = scmp.eq.s32.totalorder %s14, 0
    %p118 = por %p116, %p117
    %p119 = scmp.ne.s32.totalorder %s111, %s113
    %p120 = scmp.eq.s32.totalorder %s19, 3
    %p121 = por %p119, %p120
    %p122 = scmp.ne.s32.totalorder %s113, %s114
    %p123 = scmp.eq.s32.totalorder %s19, 0
    %p124 = por %p122, %p123
    %p125 = scmp.ne.s32.totalorder %s113, %s114
    %p126 = scmp.eq.s32.totalorder %s20, 3
    %p127 = por %p125, %p126
    %p129 = scmp.ne.s32.totalorder %s114, %s128
    %p130 = scmp.eq.s32.totalorder %s20, 0
    %p131 = por %p129, %p130
    %s133 = sadd.s32 %s132, 1
    %p136 = scmp.eq.s32.totalorder %s14, 3
    %p137 = scmp.ne.s32.totalorder %s132, %s134
    %p138 = scmp.eq.s32.totalorder %s14, 0
    %p139 = por %p137, %p138
    %p140 = scmp.ne.s32.totalorder %s132, %s134
    %p141 = scmp.eq.s32.totalorder %s19, 3
    %p142 = por %p140, %p141
    %p143 = scmp.ne.s32.totalorder %s134, %s135
    %p144 = scmp.eq.s32.totalorder %s19, 0
    %p145 = por %p143, %p144
    %p146 = scmp.ne.s32.totalorder %s134, %s135
    %p147 = scmp.eq.s32.totalorder %s20, 3
    %p148 = por %p146, %p147
    %p150 = scmp.ne.s32.totalorder %s135, %s149
    %p151 = scmp.eq.s32.totalorder %s20, 0
    %p152 = por %p150, %p151
    %s153 = ssub.s32 %s14, %s21
    %p154 = scmp.eq.s32.totalorder %s153, 0
    %s156 = sadd.s32 %s155, 1
    %s157 = scalar_select %p154, %s155, %s156
    %p160 = pneg %p154
    %p161 = scmp.eq.s32.totalorder %s14, 3
    %p162 = por %p160, %p161
    %p163 = scmp.ne.s32.totalorder %s155, %s158
    %p164 = scmp.eq.s32.totalorder %s14, 0
    %p165 = por %p163, %p164
    %p166 = scmp.ne.s32.totalorder %s155, %s158
    %p167 = scmp.eq.s32.totalorder %s19, 3
    %p168 = por %p166, %p167
    %p169 = scmp.ne.s32.totalorder %s158, %s159
    %p170 = scmp.eq.s32.totalorder %s19, 0
    %p171 = por %p169, %p170
    %p172 = scmp.ne.s32.totalorder %s158, %s159
    %p173 = scmp.eq.s32.totalorder %s20, 3
    %p174 = por %p172, %p173
    %p176 = scmp.ne.s32.totalorder %s159, %s175
    %p177 = scmp.eq.s32.totalorder %s20, 0
    %p178 = por %p176, %p177
    %p179 = scmp.le.s32.totalorder 1, %s14
    %p180 = scmp.lt.s32.totalorder %s14, 5
    %p181 = pnand %p179, %p180
    %p182 = pneg %p181
    // Predicated region
    $region9: #{gpt_forward.1} parent=5 // pred_check
      _
    $region10: #{gpt_forward.1} parent=5 // pred_check_branch
      %184 = sbr.rel (%p181) target = $region12
    $region11: #{gpt_forward.1} parent=5 // pred_region
      %s185 = ssub.s32 %s14, 1
      // Predicated region
      $region13: #{gpt_forward.1} parent=11 // pred_check
        %p186 = pneg %p61
      $region14: #{gpt_forward.1} parent=11 // pred_check_branch
        %188 = sbr.rel (%p186) target = $region16
      $region15: #{gpt_forward.1} parent=11 // pred_region
        _
      $region16: #{gpt_forward.1} parent=11 // pred_fallthru
        _
      // Predicated region
      $region17: #{gpt_forward.1} parent=11 // pred_check
        %p189 = pneg %p82
      $region18: #{gpt_forward.1} parent=11 // pred_check_branch
        %191 = sbr.rel (%p189) target = $region20
      $region19: #{gpt_forward.1} parent=11 // pred_region
        _
      $region20: #{gpt_forward.1} parent=11 // pred_fallthru
        _
      // Predicated region
      $region21: #{gpt_forward.1} parent=11 // pred_check
        %p192 = pneg %p103
      $region22: #{gpt_forward.1} parent=11 // pred_check_branch
        %194 = sbr.rel (%p192) target = $region24
      $region23: #{gpt_forward.1} parent=11 // pred_region
        _
      $region24: #{gpt_forward.1} parent=11 // pred_fallthru
        _
      // Predicated region
      $region25: #{gpt_forward.1} parent=11 // pred_check
        %p195 = pneg %p124
      $region26: #{gpt_forward.1} parent=11 // pred_check_branch
        %197 = sbr.rel (%p195) target = $region28
      $region27: #{gpt_forward.1} parent=11 // pred_region
        _
      $region28: #{gpt_forward.1} parent=11 // pred_fallthru
        _
      // Predicated region
      $region29: #{gpt_forward.1} parent=11 // pred_check
        %p198 = pneg %p145
      $region30: #{gpt_forward.1} parent=11 // pred_check_branch
        %200 = sbr.rel (%p198) target = $region32
      $region31: #{gpt_forward.1} parent=11 // pred_region
        _
      $region32: #{gpt_forward.1} parent=11 // pred_fallthru
        _
    $region12: #{gpt_forward.1} parent=5 // pred_fallthru
      _
    %p201 = scmp.lt.s32.totalorder %s14, 4
    // Predicated region
    $region33: #{gpt_forward.1} parent=5 // pred_check
      %p202 = pneg %p201
    $region34: #{gpt_forward.1} parent=5 // pred_check_branch
      %204 = sbr.rel (%p202) target = $region36
    $region35: #{gpt_forward.1} parent=5 // pred_region
      // Predicated region
      $region37: #{gpt_forward.1} parent=35 // pred_check
        %p205 = pneg %p34
      $region38: #{gpt_forward.1} parent=35 // pred_check_branch
        %207 = sbr.rel (%p205) target = $region40
      $region39: #{gpt_forward.1} parent=35 // pred_region
        %s208 = smul.u32 4, %s14
        %p209 = scmp.lt.s32.totalorder %s208, 15
        %s210 = scalar_select %p209, %s208, 15
        %s211 = smul.addr %s210, 2
        %s212 = scalar_lea.vmem %s0, %s211
        %s213 = smul.u32 4, %s14
      $region40: #{gpt_forward.1} parent=35 // pred_fallthru
        _
    $region36: #{gpt_forward.1} parent=5 // pred_fallthru
      _
    %p214 = scmp.le.s32.totalorder 1, %s14
    %p215 = scmp.lt.s32.totalorder %s14, 5
    %p216 = pnand %p214, %p215
    %p217 = pneg %p216
    // Predicated region
    $region41: #{gpt_forward.1} parent=5 // pred_check
      _
    $region42: #{gpt_forward.1} parent=5 // pred_check_branch
      %219 = sbr.rel (%p216) target = $region44
    $region43: #{gpt_forward.1} parent=5 // pred_region
      %s220 = ssub.s32 %s14, 1
      %s221 = smul.u32 4, %s19
      %p222 = scmp.lt.s32.totalorder %s221, 15
      %s223 = scalar_select %p222, %s221, 15
      %s224 = smul.addr %s223, 2
      %s225 = scalar_lea.vmem %s0, %s224
      %p226 = pneg %p40
      %p227 = pneg %p37
      %p228 = pneg %p61
      %p229 = pneg %p58
      %p230 = pneg %p82
      %p231 = pneg %p79
      %p232 = pneg %p103
      %p233 = pneg %p100
      %p234 = pneg %p124
      %p235 = pneg %p121
      %p236 = pneg %p145
      %p237 = pneg %p142
      %p238 = pneg %p171
      %p239 = pneg %p168
      %s240 = smul.u32 4, %s19
      %p241 = scmp.lt.s32.totalorder %s240, 15
      %s242 = scalar_select %p241, %s240, 15
      %s243 = scalar_lea.vmem %s6, %s242
      %s244 = smul.u32 4, %s19
      %p245 = scmp.lt.s32.totalorder %s244, 15
      %s246 = scalar_select %p245, %s244, 15
      %s247 = smul.addr %s246, 2
      %s248 = scalar_lea.vmem %s0, %s247
      %s249 = smul.u32 4, %s19
      %s250 = smul.u32 4, %s19
      %p251 = scmp.lt.s32.totalorder %s250, 15
      %s252 = scalar_select %p251, %s250, 15
      %s253 = scalar_lea.vmem %s6, %s252
      %s254 = smul.u32 4, %s19
      %v255 = vld [vmem:[%s248] ss:$2 sm:$0xf]
      %s256 = scalar_lea.vmem %s248, 1
      %v257 = vld [vmem:[%s256] ss:$2 sm:$0xf]
      %v258 = vld [vmem:[%s1] sm:$0xff]
      %v259 = vld [vmem:[%s1 + $0x8] sm:$0xff]
      %v260 = vld [vmem:[%s1 + $0x10] sm:$0xff]
      %v261 = vld [vmem:[%s1 + $0x18] sm:$0xff]
      %v262 = vld [vmem:[%s1 + $0x20] sm:$0xff]
      %v263 = vld [vmem:[%s1 + $0x28] sm:$0xff]
      %v264 = vld [vmem:[%s1 + $0x30] sm:$0xff]
      %v265 = vld [vmem:[%s1 + $0x38] sm:$0xff]
      %v266 = vld [vmem:[%s1 + $0x40] sm:$0xff]
      %v267 = vld [vmem:[%s1 + $0x48] sm:$0xff]
      %v268 = vld [vmem:[%s1 + $0x50] sm:$0xff]
      %v269 = vld [vmem:[%s1 + $0x58] sm:$0xff]
      %v270 = vld [vmem:[%s1 + $0x60] sm:$0xff]
      %v271 = vld [vmem:[%s1 + $0x68] sm:$0xff]
      %v272 = vld [vmem:[%s1 + $0x70] sm:$0xff]
      %v273 = vld [vmem:[%s1 + $0x78] sm:$0xff]
      %275 = vset.pattern.permute.xlu0 0
      %276 = vperm.xlu0 %275, %v258
      %v277 = vpop.permute.xlu0 %276
      %280 = vset.pattern.permute.xlu0 0
      %281 = vperm.xlu0 %280, %v259
      %v282 = vpop.permute.xlu0 %281
      %285 = vset.pattern.permute.xlu0 0
      %286 = vperm.xlu0 %285, %v260
      %v287 = vpop.permute.xlu0 %286
      %290 = vset.pattern.permute.xlu0 0
      %291 = vperm.xlu0 %290, %v261
      %v292 = vpop.permute.xlu0 %291
      %295 = vset.pattern.permute.xlu0 0
      %296 = vperm.xlu0 %295, %v262
      %v297 = vpop.permute.xlu0 %296
      %300 = vset.pattern.permute.xlu0 0
      %301 = vperm.xlu0 %300, %v263
      %v302 = vpop.permute.xlu0 %301
      %305 = vset.pattern.permute.xlu0 0
      %306 = vperm.xlu0 %305, %v264
      %v307 = vpop.permute.xlu0 %306
      %310 = vset.pattern.permute.xlu0 0
      %311 = vperm.xlu0 %310, %v265
      %v312 = vpop.permute.xlu0 %311
      %315 = vset.pattern.permute.xlu0 0
      %316 = vperm.xlu0 %315, %v266
      %v317 = vpop.permute.xlu0 %316
      %320 = vset.pattern.permute.xlu0 0
      %321 = vperm.xlu0 %320, %v267
      %v322 = vpop.permute.xlu0 %321
      %325 = vset.pattern.permute.xlu0 0
      %326 = vperm.xlu0 %325, %v268
      %v327 = vpop.permute.xlu0 %326
      %330 = vset.pattern.permute.xlu0 0
      %331 = vperm.xlu0 %330, %v269
      %v332 = vpop.permute.xlu0 %331
      %335 = vset.pattern.permute.xlu0 0
      %336 = vperm.xlu0 %335, %v270
      %v337 = vpop.permute.xlu0 %336
      %340 = vset.pattern.permute.xlu0 0
      %341 = vperm.xlu0 %340, %v271
      %v342 = vpop.permute.xlu0 %341
      %345 = vset.pattern.permute.xlu0 0
      %346 = vperm.xlu0 %345, %v272
      %v347 = vpop.permute.xlu0 %346
      %350 = vset.pattern.permute.xlu0 0
      %351 = vperm.xlu0 %350, %v273
      %v352 = vpop.permute.xlu0 %351
      %v355 = vperm.slane %v255, 0
      %v356 = vperm.slane %v255, 1
      %v357 = vperm.slane %v255, 2
      %v358 = vperm.slane %v255, 3
      %v363 = vmul.f32 %v277, %v355
      %v364 = vmul.f32 %v277, %v356
      %v365 = vmul.f32 %v277, %v357
      %v366 = vmul.f32 %v277, %v358
      %v367 = vmul.f32 %v282, %v355
      %v368 = vmul.f32 %v282, %v356
      %v369 = vmul.f32 %v282, %v357
      %v370 = vmul.f32 %v282, %v358
      %v371 = vmul.f32 %v287, %v355
      %v372 = vmul.f32 %v287, %v356
      %v373 = vmul.f32 %v287, %v357
      %v374 = vmul.f32 %v287, %v358
      %v375 = vmul.f32 %v292, %v355
      %v376 = vmul.f32 %v292, %v356
      %v377 = vmul.f32 %v292, %v357
      %v378 = vmul.f32 %v292, %v358
      %v379 = vmul.f32 %v297, %v355
      %v380 = vmul.f32 %v297, %v356
      %v381 = vmul.f32 %v297, %v357
      %v382 = vmul.f32 %v297, %v358
      %v383 = vmul.f32 %v302, %v355
      %v384 = vmul.f32 %v302, %v356
      %v385 = vmul.f32 %v302, %v357
      %v386 = vmul.f32 %v302, %v358
      %v387 = vmul.f32 %v307, %v355
      %v388 = vmul.f32 %v307, %v356
      %v389 = vmul.f32 %v307, %v357
      %v390 = vmul.f32 %v307, %v358
      %v391 = vmul.f32 %v312, %v355
      %v392 = vmul.f32 %v312, %v356
      %v393 = vmul.f32 %v312, %v357
      %v394 = vmul.f32 %v312, %v358
      %v395 = vmul.f32 %v317, %v355
      %v396 = vmul.f32 %v317, %v356
      %v397 = vmul.f32 %v317, %v357
      %v398 = vmul.f32 %v317, %v358
      %v399 = vmul.f32 %v322, %v355
      %v400 = vmul.f32 %v322, %v356
      %v401 = vmul.f32 %v322, %v357
      %v402 = vmul.f32 %v322, %v358
      %v403 = vmul.f32 %v327, %v355
      %v404 = vmul.f32 %v327, %v356
      %v405 = vmul.f32 %v327, %v357
      %v406 = vmul.f32 %v327, %v358
      %v407 = vmul.f32 %v332, %v355
      %v408 = vmul.f32 %v332, %v356
      %v409 = vmul.f32 %v332, %v357
      %v410 = vmul.f32 %v332, %v358
      %v411 = vmul.f32 %v337, %v355
      %v412 = vmul.f32 %v337, %v356
      %v413 = vmul.f32 %v337, %v357
      %v414 = vmul.f32 %v337, %v358
      %v415 = vmul.f32 %v342, %v355
      %v416 = vmul.f32 %v342, %v356
      %v417 = vmul.f32 %v342, %v357
      %v418 = vmul.f32 %v342, %v358
      %v419 = vmul.f32 %v347, %v355
      %v420 = vmul.f32 %v347, %v356
      %v421 = vmul.f32 %v347, %v357
      %v422 = vmul.f32 %v347, %v358
      %v423 = vmul.f32 %v352, %v355
      %v424 = vmul.f32 %v352, %v356
      %v425 = vmul.f32 %v352, %v357
      %v426 = vmul.f32 %v352, %v358
      %v427 = vld [vmem:[%s2] sm:$0xff]
      %v428 = vld [vmem:[%s2 + $0x8] sm:$0xff]
      %v429 = vld [vmem:[%s2 + $0x10] sm:$0xff]
      %v430 = vld [vmem:[%s2 + $0x18] sm:$0xff]
      %v431 = vld [vmem:[%s2 + $0x20] sm:$0xff]
      %v432 = vld [vmem:[%s2 + $0x28] sm:$0xff]
      %v433 = vld [vmem:[%s2 + $0x30] sm:$0xff]
      %v434 = vld [vmem:[%s2 + $0x38] sm:$0xff]
      %v435 = vld [vmem:[%s2 + $0x40] sm:$0xff]
      %v436 = vld [vmem:[%s2 + $0x48] sm:$0xff]
      %v437 = vld [vmem:[%s2 + $0x50] sm:$0xff]
      %v438 = vld [vmem:[%s2 + $0x58] sm:$0xff]
      %v439 = vld [vmem:[%s2 + $0x60] sm:$0xff]
      %v440 = vld [vmem:[%s2 + $0x68] sm:$0xff]
      %v441 = vld [vmem:[%s2 + $0x70] sm:$0xff]
      %v442 = vld [vmem:[%s2 + $0x78] sm:$0xff]
      %444 = vset.pattern.permute.xlu0 0
      %445 = vperm.xlu0 %444, %v427
      %v446 = vpop.permute.xlu0 %445
      %449 = vset.pattern.permute.xlu0 0
      %450 = vperm.xlu0 %449, %v428
      %v451 = vpop.permute.xlu0 %450
      %454 = vset.pattern.permute.xlu0 0
      %455 = vperm.xlu0 %454, %v429
      %v456 = vpop.permute.xlu0 %455
      %459 = vset.pattern.permute.xlu0 0
      %460 = vperm.xlu0 %459, %v430
      %v461 = vpop.permute.xlu0 %460
      %464 = vset.pattern.permute.xlu0 0
      %465 = vperm.xlu0 %464, %v431
      %v466 = vpop.permute.xlu0 %465
      %469 = vset.pattern.permute.xlu0 0
      %470 = vperm.xlu0 %469, %v432
      %v471 = vpop.permute.xlu0 %470
      %474 = vset.pattern.permute.xlu0 0
      %475 = vperm.xlu0 %474, %v433
      %v476 = vpop.permute.xlu0 %475
      %479 = vset.pattern.permute.xlu0 0
      %480 = vperm.xlu0 %479, %v434
      %v481 = vpop.permute.xlu0 %480
      %484 = vset.pattern.permute.xlu0 0
      %485 = vperm.xlu0 %484, %v435
      %v486 = vpop.permute.xlu0 %485
      %489 = vset.pattern.permute.xlu0 0
      %490 = vperm.xlu0 %489, %v436
      %v491 = vpop.permute.xlu0 %490
      %494 = vset.pattern.permute.xlu0 0
      %495 = vperm.xlu0 %494, %v437
      %v496 = vpop.permute.xlu0 %495
      %499 = vset.pattern.permute.xlu0 0
      %500 = vperm.xlu0 %499, %v438
      %v501 = vpop.permute.xlu0 %500
      %504 = vset.pattern.permute.xlu0 0
      %505 = vperm.xlu0 %504, %v439
      %v506 = vpop.permute.xlu0 %505
      %509 = vset.pattern.permute.xlu0 0
      %510 = vperm.xlu0 %509, %v440
      %v511 = vpop.permute.xlu0 %510
      %514 = vset.pattern.permute.xlu0 0
      %515 = vperm.xlu0 %514, %v441
      %v516 = vpop.permute.xlu0 %515
      %519 = vset.pattern.permute.xlu0 0
      %520 = vperm.xlu0 %519, %v442
      %v521 = vpop.permute.xlu0 %520
      %v524 = vperm.slane %v257, 0
      %v525 = vperm.slane %v257, 1
      %v526 = vperm.slane %v257, 2
      %v527 = vperm.slane %v257, 3
      %v532 = vmul.f32 %v446, %v524
      %v533 = vmul.f32 %v446, %v525
      %v534 = vmul.f32 %v446, %v526
      %v535 = vmul.f32 %v446, %v527
      %v536 = vmul.f32 %v451, %v524
      %v537 = vmul.f32 %v451, %v525
      %v538 = vmul.f32 %v451, %v526
      %v539 = vmul.f32 %v451, %v527
      %v540 = vmul.f32 %v456, %v524
      %v541 = vmul.f32 %v456, %v525
      %v542 = vmul.f32 %v456, %v526
      %v543 = vmul.f32 %v456, %v527
      %v544 = vmul.f32 %v461, %v524
      %v545 = vmul.f32 %v461, %v525
      %v546 = vmul.f32 %v461, %v526
      %v547 = vmul.f32 %v461, %v527
      %v548 = vmul.f32 %v466, %v524
      %v549 = vmul.f32 %v466, %v525
      %v550 = vmul.f32 %v466, %v526
      %v551 = vmul.f32 %v466, %v527
      %v552 = vmul.f32 %v471, %v524
      %v553 = vmul.f32 %v471, %v525
      %v554 = vmul.f32 %v471, %v526
      %v555 = vmul.f32 %v471, %v527
      %v556 = vmul.f32 %v476, %v524
      %v557 = vmul.f32 %v476, %v525
      %v558 = vmul.f32 %v476, %v526
      %v559 = vmul.f32 %v476, %v527
      %v560 = vmul.f32 %v481, %v524
      %v561 = vmul.f32 %v481, %v525
      %v562 = vmul.f32 %v481, %v526
      %v563 = vmul.f32 %v481, %v527
      %v564 = vmul.f32 %v486, %v524
      %v565 = vmul.f32 %v486, %v525
      %v566 = vmul.f32 %v486, %v526
      %v567 = vmul.f32 %v486, %v527
      %v568 = vmul.f32 %v491, %v524
      %v569 = vmul.f32 %v491, %v525
      %v570 = vmul.f32 %v491, %v526
      %v571 = vmul.f32 %v491, %v527
      %v572 = vmul.f32 %v496, %v524
      %v573 = vmul.f32 %v496, %v525
      %v574 = vmul.f32 %v496, %v526
      %v575 = vmul.f32 %v496, %v527
      %v576 = vmul.f32 %v501, %v524
      %v577 = vmul.f32 %v501, %v525
      %v578 = vmul.f32 %v501, %v526
      %v579 = vmul.f32 %v501, %v527
      %v580 = vmul.f32 %v506, %v524
      %v581 = vmul.f32 %v506, %v525
      %v582 = vmul.f32 %v506, %v526
      %v583 = vmul.f32 %v506, %v527
      %v584 = vmul.f32 %v511, %v524
      %v585 = vmul.f32 %v511, %v525
      %v586 = vmul.f32 %v511, %v526
      %v587 = vmul.f32 %v511, %v527
      %v588 = vmul.f32 %v516, %v524
      %v589 = vmul.f32 %v516, %v525
      %v590 = vmul.f32 %v516, %v526
      %v591 = vmul.f32 %v516, %v527
      %v592 = vmul.f32 %v521, %v524
      %v593 = vmul.f32 %v521, %v525
      %v594 = vmul.f32 %v521, %v526
      %v595 = vmul.f32 %v521, %v527
      %v596 = vadd.f32 %v363, %v532
      %v597 = vadd.f32 %v364, %v533
      %v598 = vadd.f32 %v365, %v534
      %v599 = vadd.f32 %v366, %v535
      %v600 = vadd.f32 %v367, %v536
      %v601 = vadd.f32 %v368, %v537
      %v602 = vadd.f32 %v369, %v538
      %v603 = vadd.f32 %v370, %v539
      %v604 = vadd.f32 %v371, %v540
      %v605 = vadd.f32 %v372, %v541
      %v606 = vadd.f32 %v373, %v542
      %v607 = vadd.f32 %v374, %v543
      %v608 = vadd.f32 %v375, %v544
      %v609 = vadd.f32 %v376, %v545
      %v610 = vadd.f32 %v377, %v546
      %v611 = vadd.f32 %v378, %v547
      %v612 = vadd.f32 %v379, %v548
      %v613 = vadd.f32 %v380, %v549
      %v614 = vadd.f32 %v381, %v550
      %v615 = vadd.f32 %v382, %v551
      %v616 = vadd.f32 %v383, %v552
      %v617 = vadd.f32 %v384, %v553
      %v618 = vadd.f32 %v385, %v554
      %v619 = vadd.f32 %v386, %v555
      %v620 = vadd.f32 %v387, %v556
      %v621 = vadd.f32 %v388, %v557
      %v622 = vadd.f32 %v389, %v558
      %v623 = vadd.f32 %v390, %v559
      %v624 = vadd.f32 %v391, %v560
      %v625 = vadd.f32 %v392, %v561
      %v626 = vadd.f32 %v393, %v562
      %v627 = vadd.f32 %v394, %v563
      %v628 = vadd.f32 %v395, %v564
      %v629 = vadd.f32 %v396, %v565
      %v630 = vadd.f32 %v397, %v566
      %v631 = vadd.f32 %v398, %v567
      %v632 = vadd.f32 %v399, %v568
      %v633 = vadd.f32 %v400, %v569
      %v634 = vadd.f32 %v401, %v570
      %v635 = vadd.f32 %v402, %v571
      %v636 = vadd.f32 %v403, %v572
      %v637 = vadd.f32 %v404, %v573
      %v638 = vadd.f32 %v405, %v574
      %v639 = vadd.f32 %v406, %v575
      %v640 = vadd.f32 %v407, %v576
      %v641 = vadd.f32 %v408, %v577
      %v642 = vadd.f32 %v409, %v578
      %v643 = vadd.f32 %v410, %v579
      %v644 = vadd.f32 %v411, %v580
      %v645 = vadd.f32 %v412, %v581
      %v646 = vadd.f32 %v413, %v582
      %v647 = vadd.f32 %v414, %v583
      %v648 = vadd.f32 %v415, %v584
      %v649 = vadd.f32 %v416, %v585
      %v650 = vadd.f32 %v417, %v586
      %v651 = vadd.f32 %v418, %v587
      %v652 = vadd.f32 %v419, %v588
      %v653 = vadd.f32 %v420, %v589
      %v654 = vadd.f32 %v421, %v590
      %v655 = vadd.f32 %v422, %v591
      %v656 = vadd.f32 %v423, %v592
      %v657 = vadd.f32 %v424, %v593
      %v658 = vadd.f32 %v425, %v594
      %v659 = vadd.f32 %v426, %v595
      %v660 = vld [vmem:[%s3] sm:$0xff]
      %v661 = vld [vmem:[%s3 + $0x8] sm:$0xff]
      %v662 = vld [vmem:[%s3 + $0x10] sm:$0xff]
      %v663 = vld [vmem:[%s3 + $0x18] sm:$0xff]
      %v664 = vld [vmem:[%s3 + $0x20] sm:$0xff]
      %v665 = vld [vmem:[%s3 + $0x28] sm:$0xff]
      %v666 = vld [vmem:[%s3 + $0x30] sm:$0xff]
      %v667 = vld [vmem:[%s3 + $0x38] sm:$0xff]
      %v668 = vld [vmem:[%s3 + $0x40] sm:$0xff]
      %v669 = vld [vmem:[%s3 + $0x48] sm:$0xff]
      %v670 = vld [vmem:[%s3 + $0x50] sm:$0xff]
      %v671 = vld [vmem:[%s3 + $0x58] sm:$0xff]
      %v672 = vld [vmem:[%s3 + $0x60] sm:$0xff]
      %v673 = vld [vmem:[%s3 + $0x68] sm:$0xff]
      %v674 = vld [vmem:[%s3 + $0x70] sm:$0xff]
      %v675 = vld [vmem:[%s3 + $0x78] sm:$0xff]
      %677 = vset.pattern.permute.xlu0 0
      %678 = vperm.xlu0 %677, %v660
      %v679 = vpop.permute.xlu0 %678
      %682 = vset.pattern.permute.xlu0 0
      %683 = vperm.xlu0 %682, %v661
      %v684 = vpop.permute.xlu0 %683
      %687 = vset.pattern.permute.xlu0 0
      %688 = vperm.xlu0 %687, %v662
      %v689 = vpop.permute.xlu0 %688
      %692 = vset.pattern.permute.xlu0 0
      %693 = vperm.xlu0 %692, %v663
      %v694 = vpop.permute.xlu0 %693
      %697 = vset.pattern.permute.xlu0 0
      %698 = vperm.xlu0 %697, %v664
      %v699 = vpop.permute.xlu0 %698
      %702 = vset.pattern.permute.xlu0 0
      %703 = vperm.xlu0 %702, %v665
      %v704 = vpop.permute.xlu0 %703
      %707 = vset.pattern.permute.xlu0 0
      %708 = vperm.xlu0 %707, %v666
      %v709 = vpop.permute.xlu0 %708
      %712 = vset.pattern.permute.xlu0 0
      %713 = vperm.xlu0 %712, %v667
      %v714 = vpop.permute.xlu0 %713
      %717 = vset.pattern.permute.xlu0 0
      %718 = vperm.xlu0 %717, %v668
      %v719 = vpop.permute.xlu0 %718
      %722 = vset.pattern.permute.xlu0 0
      %723 = vperm.xlu0 %722, %v669
      %v724 = vpop.permute.xlu0 %723
      %727 = vset.pattern.permute.xlu0 0
      %728 = vperm.xlu0 %727, %v670
      %v729 = vpop.permute.xlu0 %728
      %732 = vset.pattern.permute.xlu0 0
      %733 = vperm.xlu0 %732, %v671
      %v734 = vpop.permute.xlu0 %733
      %737 = vset.pattern.permute.xlu0 0
      %738 = vperm.xlu0 %737, %v672
      %v739 = vpop.permute.xlu0 %738
      %742 = vset.pattern.permute.xlu0 0
      %743 = vperm.xlu0 %742, %v673
      %v744 = vpop.permute.xlu0 %743
      %747 = vset.pattern.permute.xlu0 0
      %748 = vperm.xlu0 %747, %v674
      %v749 = vpop.permute.xlu0 %748
      %752 = vset.pattern.permute.xlu0 0
      %753 = vperm.xlu0 %752, %v675
      %v754 = vpop.permute.xlu0 %753
      %v756 = vadd.f32 %v596, %v679
      %v757 = vadd.f32 %v597, %v679
      %v758 = vadd.f32 %v598, %v679
      %v759 = vadd.f32 %v599, %v679
      %v760 = vadd.f32 %v600, %v684
      %v761 = vadd.f32 %v601, %v684
      %v762 = vadd.f32 %v602, %v684
      %v763 = vadd.f32 %v603, %v684
      %v764 = vadd.f32 %v604, %v689
      %v765 = vadd.f32 %v605, %v689
      %v766 = vadd.f32 %v606, %v689
      %v767 = vadd.f32 %v607, %v689
      %v768 = vadd.f32 %v608, %v694
      %v769 = vadd.f32 %v609, %v694
      %v770 = vadd.f32 %v610, %v694
      %v771 = vadd.f32 %v611, %v694
      %v772 = vadd.f32 %v612, %v699
      %v773 = vadd.f32 %v613, %v699
      %v774 = vadd.f32 %v614, %v699
      %v775 = vadd.f32 %v615, %v699
      %v776 = vadd.f32 %v616, %v704
      %v777 = vadd.f32 %v617, %v704
      %v778 = vadd.f32 %v618, %v704
      %v779 = vadd.f32 %v619, %v704
      %v780 = vadd.f32 %v620, %v709
      %v781 = vadd.f32 %v621, %v709
      %v782 = vadd.f32 %v622, %v709
      %v783 = vadd.f32 %v623, %v709
      %v784 = vadd.f32 %v624, %v714
      %v785 = vadd.f32 %v625, %v714
      %v786 = vadd.f32 %v626, %v714
      %v787 = vadd.f32 %v627, %v714
      %v788 = vadd.f32 %v628, %v719
      %v789 = vadd.f32 %v629, %v719
      %v790 = vadd.f32 %v630, %v719
      %v791 = vadd.f32 %v631, %v719
      %v792 = vadd.f32 %v632, %v724
      %v793 = vadd.f32 %v633, %v724
      %v794 = vadd.f32 %v634, %v724
      %v795 = vadd.f32 %v635, %v724
      %v796 = vadd.f32 %v636, %v729
      %v797 = vadd.f32 %v637, %v729
      %v798 = vadd.f32 %v638, %v729
      %v799 = vadd.f32 %v639, %v729
      %v800 = vadd.f32 %v640, %v734
      %v801 = vadd.f32 %v641, %v734
      %v802 = vadd.f32 %v642, %v734
      %v803 = vadd.f32 %v643, %v734
      %v804 = vadd.f32 %v644, %v739
      %v805 = vadd.f32 %v645, %v739
      %v806 = vadd.f32 %v646, %v739
      %v807 = vadd.f32 %v647, %v739
      %v808 = vadd.f32 %v648, %v744
      %v809 = vadd.f32 %v649, %v744
      %v810 = vadd.f32 %v650, %v744
      %v811 = vadd.f32 %v651, %v744
      %v812 = vadd.f32 %v652, %v749
      %v813 = vadd.f32 %v653, %v749
      %v814 = vadd.f32 %v654, %v749
      %v815 = vadd.f32 %v655, %v749
      %v816 = vadd.f32 %v656, %v754
      %v817 = vadd.f32 %v657, %v754
      %v818 = vadd.f32 %v658, %v754
      %v819 = vadd.f32 %v659, %v754
      %v820 = vtanh.pop %v756
      %v821 = vtanh.pop %v757
      %v822 = vtanh.pop %v758
      %v823 = vtanh.pop %v759
      %v824 = vtanh.pop %v760
      %v825 = vtanh.pop %v761
      %v826 = vtanh.pop %v762
      %v827 = vtanh.pop %v763
      %v828 = vtanh.pop %v764
      %v829 = vtanh.pop %v765
      %v830 = vtanh.pop %v766
      %v831 = vtanh.pop %v767
      %v832 = vtanh.pop %v768
      %v833 = vtanh.pop %v769
      %v834 = vtanh.pop %v770
      %v835 = vtanh.pop %v771
      %v836 = vtanh.pop %v772
      %v837 = vtanh.pop %v773
      %v838 = vtanh.pop %v774
      %v839 = vtanh.pop %v775
      %v840 = vtanh.pop %v776
      %v841 = vtanh.pop %v777
      %v842 = vtanh.pop %v778
      %v843 = vtanh.pop %v779
      %v844 = vtanh.pop %v780
      %v845 = vtanh.pop %v781
      %v846 = vtanh.pop %v782
      %v847 = vtanh.pop %v783
      %v848 = vtanh.pop %v784
      %v849 = vtanh.pop %v785
      %v850 = vtanh.pop %v786
      %v851 = vtanh.pop %v787
      %v852 = vtanh.pop %v788
      %v853 = vtanh.pop %v789
      %v854 = vtanh.pop %v790
      %v855 = vtanh.pop %v791
      %v856 = vtanh.pop %v792
      %v857 = vtanh.pop %v793
      %v858 = vtanh.pop %v794
      %v859 = vtanh.pop %v795
      %v860 = vtanh.pop %v796
      %v861 = vtanh.pop %v797
      %v862 = vtanh.pop %v798
      %v863 = vtanh.pop %v799
      %v864 = vtanh.pop %v800
      %v865 = vtanh.pop %v801
      %v866 = vtanh.pop %v802
      %v867 = vtanh.pop %v803
      %v868 = vtanh.pop %v804
      %v869 = vtanh.pop %v805
      %v870 = vtanh.pop %v806
      %v871 = vtanh.pop %v807
      %v872 = vtanh.pop %v808
      %v873 = vtanh.pop %v809
      %v874 = vtanh.pop %v810
      %v875 = vtanh.pop %v811
      %v876 = vtanh.pop %v812
      %v877 = vtanh.pop %v813
      %v878 = vtanh.pop %v814
      %v879 = vtanh.pop %v815
      %v880 = vtanh.pop %v816
      %v881 = vtanh.pop %v817
      %v882 = vtanh.pop %v818
      %v883 = vtanh.pop %v819
      %v884 = vld [vmem:[%s4] sm:$0xff]
      %v885 = vld [vmem:[%s4 + $0x8] sm:$0xff]
      %v886 = vld [vmem:[%s4 + $0x10] sm:$0xff]
      %v887 = vld [vmem:[%s4 + $0x18] sm:$0xff]
      %v888 = vld [vmem:[%s4 + $0x20] sm:$0xff]
      %v889 = vld [vmem:[%s4 + $0x28] sm:$0xff]
      %v890 = vld [vmem:[%s4 + $0x30] sm:$0xff]
      %v891 = vld [vmem:[%s4 + $0x38] sm:$0xff]
      %v892 = vld [vmem:[%s4 + $0x40] sm:$0xff]
      %v893 = vld [vmem:[%s4 + $0x48] sm:$0xff]
      %v894 = vld [vmem:[%s4 + $0x50] sm:$0xff]
      %v895 = vld [vmem:[%s4 + $0x58] sm:$0xff]
      %v896 = vld [vmem:[%s4 + $0x60] sm:$0xff]
      %v897 = vld [vmem:[%s4 + $0x68] sm:$0xff]
      %v898 = vld [vmem:[%s4 + $0x70] sm:$0xff]
      %v899 = vld [vmem:[%s4 + $0x78] sm:$0xff]
      %901 = vset.pattern.permute.xlu0 0
      %902 = vperm.xlu0 %901, %v884
      %v903 = vpop.permute.xlu0 %902
      %906 = vset.pattern.permute.xlu0 0
      %907 = vperm.xlu0 %906, %v885
      %v908 = vpop.permute.xlu0 %907
      %911 = vset.pattern.permute.xlu0 0
      %912 = vperm.xlu0 %911, %v886
      %v913 = vpop.permute.xlu0 %912
      %916 = vset.pattern.permute.xlu0 0
      %917 = vperm.xlu0 %916, %v887
      %v918 = vpop.permute.xlu0 %917
      %921 = vset.pattern.permute.xlu0 0
      %922 = vperm.xlu0 %921, %v888
      %v923 = vpop.permute.xlu0 %922
      %926 = vset.pattern.permute.xlu0 0
      %927 = vperm.xlu0 %926, %v889
      %v928 = vpop.permute.xlu0 %927
      %931 = vset.pattern.permute.xlu0 0
      %932 = vperm.xlu0 %931, %v890
      %v933 = vpop.permute.xlu0 %932
      %936 = vset.pattern.permute.xlu0 0
      %937 = vperm.xlu0 %936, %v891
      %v938 = vpop.permute.xlu0 %937
      %941 = vset.pattern.permute.xlu0 0
      %942 = vperm.xlu0 %941, %v892
      %v943 = vpop.permute.xlu0 %942
      %946 = vset.pattern.permute.xlu0 0
      %947 = vperm.xlu0 %946, %v893
      %v948 = vpop.permute.xlu0 %947
      %951 = vset.pattern.permute.xlu0 0
      %952 = vperm.xlu0 %951, %v894
      %v953 = vpop.permute.xlu0 %952
      %956 = vset.pattern.permute.xlu0 0
      %957 = vperm.xlu0 %956, %v895
      %v958 = vpop.permute.xlu0 %957
      %961 = vset.pattern.permute.xlu0 0
      %962 = vperm.xlu0 %961, %v896
      %v963 = vpop.permute.xlu0 %962
      %966 = vset.pattern.permute.xlu0 0
      %967 = vperm.xlu0 %966, %v897
      %v968 = vpop.permute.xlu0 %967
      %971 = vset.pattern.permute.xlu0 0
      %972 = vperm.xlu0 %971, %v898
      %v973 = vpop.permute.xlu0 %972
      %976 = vset.pattern.permute.xlu0 0
      %977 = vperm.xlu0 %976, %v899
      %v978 = vpop.permute.xlu0 %977
      %v980 = vmul.f32 %v820, %v903
      %v981 = vmul.f32 %v821, %v903
      %v982 = vmul.f32 %v822, %v903
      %v983 = vmul.f32 %v823, %v903
      %v984 = vmul.f32 %v824, %v908
      %v985 = vmul.f32 %v825, %v908
      %v986 = vmul.f32 %v826, %v908
      %v987 = vmul.f32 %v827, %v908
      %v988 = vmul.f32 %v828, %v913
      %v989 = vmul.f32 %v829, %v913
      %v990 = vmul.f32 %v830, %v913
      %v991 = vmul.f32 %v831, %v913
      %v992 = vmul.f32 %v832, %v918
      %v993 = vmul.f32 %v833, %v918
      %v994 = vmul.f32 %v834, %v918
      %v995 = vmul.f32 %v835, %v918
      %v996 = vmul.f32 %v836, %v923
      %v997 = vmul.f32 %v837, %v923
      %v998 = vmul.f32 %v838, %v923
      %v999 = vmul.f32 %v839, %v923
      %v1000 = vmul.f32 %v840, %v928
      %v1001 = vmul.f32 %v841, %v928
      %v1002 = vmul.f32 %v842, %v928
      %v1003 = vmul.f32 %v843, %v928
      %v1004 = vmul.f32 %v844, %v933
      %v1005 = vmul.f32 %v845, %v933
      %v1006 = vmul.f32 %v846, %v933
      %v1007 = vmul.f32 %v847, %v933
      %v1008 = vmul.f32 %v848, %v938
      %v1009 = vmul.f32 %v849, %v938
      %v1010 = vmul.f32 %v850, %v938
      %v1011 = vmul.f32 %v851, %v938
      %v1012 = vmul.f32 %v852, %v943
      %v1013 = vmul.f32 %v853, %v943
      %v1014 = vmul.f32 %v854, %v943
      %v1015 = vmul.f32 %v855, %v943
      %v1016 = vmul.f32 %v856, %v948
      %v1017 = vmul.f32 %v857, %v948
      %v1018 = vmul.f32 %v858, %v948
      %v1019 = vmul.f32 %v859, %v948
      %v1020 = vmul.f32 %v860, %v953
      %v1021 = vmul.f32 %v861, %v953
      %v1022 = vmul.f32 %v862, %v953
      %v1023 = vmul.f32 %v863, %v953
      %v1024 = vmul.f32 %v864, %v958
      %v1025 = vmul.f32 %v865, %v958
      %v1026 = vmul.f32 %v866, %v958
      %v1027 = vmul.f32 %v867, %v958
      %v1028 = vmul.f32 %v868, %v963
      %v1029 = vmul.f32 %v869, %v963
      %v1030 = vmul.f32 %v870, %v963
      %v1031 = vmul.f32 %v871, %v963
      %v1032 = vmul.f32 %v872, %v968
      %v1033 = vmul.f32 %v873, %v968
      %v1034 = vmul.f32 %v874, %v968
      %v1035 = vmul.f32 %v875, %v968
      %v1036 = vmul.f32 %v876, %v973
      %v1037 = vmul.f32 %v877, %v973
      %v1038 = vmul.f32 %v878, %v973
      %v1039 = vmul.f32 %v879, %v973
      %v1040 = vmul.f32 %v880, %v978
      %v1041 = vmul.f32 %v881, %v978
      %v1042 = vmul.f32 %v882, %v978
      %v1043 = vmul.f32 %v883, %v978
      %v1044 = vadd.f32 %v980, %v984
      %v1045 = vadd.f32 %v1044, %v988
      %v1046 = vadd.f32 %v1045, %v992
      %v1047 = vadd.f32 %v1046, %v996
      %v1048 = vadd.f32 %v1047, %v1000
      %v1049 = vadd.f32 %v1048, %v1004
      %v1050 = vadd.f32 %v1049, %v1008
      %v1051 = vadd.f32 %v1050, %v1012
      %v1052 = vadd.f32 %v1051, %v1016
      %v1053 = vadd.f32 %v1052, %v1020
      %v1054 = vadd.f32 %v1053, %v1024
      %v1055 = vadd.f32 %v1054, %v1028
      %v1056 = vadd.f32 %v1055, %v1032
      %v1057 = vadd.f32 %v1056, %v1036
      %v1058 = vadd.f32 %v1057, %v1040
      %v1059 = vrot.slane %v1058, 4
      %v1060 = vadd.f32 %v1058, %v1059
      %v1061 = vrot.slane %v1060, 2
      %v1062 = vadd.f32 %v1060, %v1061
      %v1063 = vrot.slane %v1062, 1
      %v1064 = vadd.f32 %v1062, %v1063
      %v1065 = vadd.f32 %v981, %v985
      %v1066 = vadd.f32 %v1065, %v989
      %v1067 = vadd.f32 %v1066, %v993
      %v1068 = vadd.f32 %v1067, %v997
      %v1069 = vadd.f32 %v1068, %v1001
      %v1070 = vadd.f32 %v1069, %v1005
      %v1071 = vadd.f32 %v1070, %v1009
      %v1072 = vadd.f32 %v1071, %v1013
      %v1073 = vadd.f32 %v1072, %v1017
      %v1074 = vadd.f32 %v1073, %v1021
      %v1075 = vadd.f32 %v1074, %v1025
      %v1076 = vadd.f32 %v1075, %v1029
      %v1077 = vadd.f32 %v1076, %v1033
      %v1078 = vadd.f32 %v1077, %v1037
      %v1079 = vadd.f32 %v1078, %v1041
      %v1080 = vrot.slane %v1079, 4
      %v1081 = vadd.f32 %v1079, %v1080
      %v1082 = vrot.slane %v1081, 2
      %v1083 = vadd.f32 %v1081, %v1082
      %v1084 = vrot.slane %v1083, 1
      %v1085 = vadd.f32 %v1083, %v1084
      %v1086 = vadd.f32 %v982, %v986
      %v1087 = vadd.f32 %v1086, %v990
      %v1088 = vadd.f32 %v1087, %v994
      %v1089 = vadd.f32 %v1088, %v998
      %v1090 = vadd.f32 %v1089, %v1002
      %v1091 = vadd.f32 %v1090, %v1006
      %v1092 = vadd.f32 %v1091, %v1010
      %v1093 = vadd.f32 %v1092, %v1014
      %v1094 = vadd.f32 %v1093, %v1018
      %v1095 = vadd.f32 %v1094, %v1022
      %v1096 = vadd.f32 %v1095, %v1026
      %v1097 = vadd.f32 %v1096, %v1030
      %v1098 = vadd.f32 %v1097, %v1034
      %v1099 = vadd.f32 %v1098, %v1038
      %v1100 = vadd.f32 %v1099, %v1042
      %v1101 = vrot.slane %v1100, 4
      %v1102 = vadd.f32 %v1100, %v1101
      %v1103 = vrot.slane %v1102, 2
      %v1104 = vadd.f32 %v1102, %v1103
      %v1105 = vrot.slane %v1104, 1
      %v1106 = vadd.f32 %v1104, %v1105
      %v1107 = vadd.f32 %v983, %v987
      %v1108 = vadd.f32 %v1107, %v991
      %v1109 = vadd.f32 %v1108, %v995
      %v1110 = vadd.f32 %v1109, %v999
      %v1111 = vadd.f32 %v1110, %v1003
      %v1112 = vadd.f32 %v1111, %v1007
      %v1113 = vadd.f32 %v1112, %v1011
      %v1114 = vadd.f32 %v1113, %v1015
      %v1115 = vadd.f32 %v1114, %v1019
      %v1116 = vadd.f32 %v1115, %v1023
      %v1117 = vadd.f32 %v1116, %v1027
      %v1118 = vadd.f32 %v1117, %v1031
      %v1119 = vadd.f32 %v1118, %v1035
      %v1120 = vadd.f32 %v1119, %v1039
      %v1121 = vadd.f32 %v1120, %v1043
      %v1122 = vrot.slane %v1121, 4
      %v1123 = vadd.f32 %v1121, %v1122
      %v1124 = vrot.slane %v1123, 2
      %v1125 = vadd.f32 %v1123, %v1124
      %v1126 = vrot.slane %v1125, 1
      %v1127 = vadd.f32 %v1125, %v1126
      %v1128 = vld [vmem:[#allocation2] sm:$0x1]
      %1130 = vset.pattern.permute.xlu0 0
      %1131 = vperm.xlu0 %1130, %v1128
      %v1132 = vpop.permute.xlu0 %1131
      %v1134 = vperm.slane %v1132, 0
      %v1135 = vadd.f32 %v1064, %v1134
      %v1136 = vadd.f32 %v1085, %v1134
      %v1137 = vadd.f32 %v1106, %v1134
      %v1138 = vadd.f32 %v1127, %v1134
      %v1143 = vrot.slane %v1136, 7
      %v1144 = vrot.slane %v1137, 6
      %v1145 = vrot.slane %v1138, 5
      %vm1146 = vcmask 1040384
      %v1147 = vsel %vm1146, %v1135, %v1143
      %vm1148 = vcmask 1042434
      %v1149 = vsel %vm1148, %v1144, %v1145
      %vm1150 = vcmask 1041408
      %v1151 = vsel %vm1150, %v1147, %v1149
      %v1153 = vlaneseq
      %vm1154 = vcmp.ge.s32.totalorder %v1153, 0
      %vm1155 = vcmp.lt.s32.totalorder %v1153, 512
      %vm1156 = vmand %vm1154, %vm1155
      %1157 = vst.msk [vmem:[%s253] sm:$0xf] %vm1156, %v1151
      %s1158 = smul.u32 4, %s19
      %p1159 = scmp.lt.s32.totalorder %s1158, 15
      %s1160 = scalar_select %p1159, %s1158, 15
      %s1161 = scalar_lea.vmem %s6, %s1160
      // Predicated region
      $region45: #{gpt_forward.1} parent=43 // pred_check
        %p1162 = pneg %p168
      $region46: #{gpt_forward.1} parent=43 // pred_check_branch
        %1164 = sbr.rel (%p1162) target = $region48
      $region47: #{gpt_forward.1} parent=43 // pred_region
        %s1165 = smul.u32 4, %s19
      $region48: #{gpt_forward.1} parent=43 // pred_fallthru
        _
    $region44: #{gpt_forward.1} parent=5 // pred_fallthru
      _
    %p1166 = scmp.le.s32.totalorder 2, %s14
    // Predicated region
    $region49: #{gpt_forward.1} parent=5 // pred_check
      %p1167 = pneg %p1166
    $region50: #{gpt_forward.1} parent=5 // pred_check_branch
      %1169 = sbr.rel (%p1167) target = $region52
    $region51: #{gpt_forward.1} parent=5 // pred_region
      %s1170 = ssub.s32 %s14, 2
      // Predicated region
      $region53: #{gpt_forward.1} parent=51 // pred_check
        %p1171 = pneg %p174
      $region54: #{gpt_forward.1} parent=51 // pred_check_branch
        %1173 = sbr.rel (%p1171) target = $region56
      $region55: #{gpt_forward.1} parent=51 // pred_region
        %s1174 = smul.u32 4, %s20
        %p1175 = scmp.lt.s32.totalorder %s1174, 15
        %s1176 = scalar_select %p1175, %s1174, 15
        %s1177 = scalar_lea.vmem %s6, %s1176
      $region56: #{gpt_forward.1} parent=51 // pred_fallthru
        _
    $region52: #{gpt_forward.1} parent=5 // pred_fallthru
      _
  $region6: #{gpt_forward.1} parent=0 // loop_footer
    %s18 = sadd.s32 1, %s14
  $region7: #{gpt_forward.1} parent=0 // loop_footer_branch
    %13 = sbr.rel target = $region3
  $region8: #{gpt_forward.1} parent=0 // loop_exit
    _

</llo_original>
